<compile_context>
chip_gen: v7x
topology: tpu7x:2x2x1
jax: 0.10.0
libtpu: 0.0.40
codegen_flags: <defaults>
</compile_context>

<pallas_src>
import math

import jax
import jax.numpy as jnp
from jax.experimental import pallas as pl
from jax.experimental.pallas import tpu as pltpu


def make_positional_encoding(d_model, max_len):
    """pe[max_len, d_model] float32, built exactly like the torch buffer."""
    assert d_model % 2 == 0, "torch buffer fill requires even d_model"
    position = jnp.arange(max_len, dtype=jnp.float32)[:, None]              # (L, 1)
    div_term = jnp.exp(jnp.arange(0, d_model, 2, dtype=jnp.float32)
                       * (-math.log(10000.0) / d_model))                    # (D/2,)
    angle = position * div_term                                             # (L, D/2)
    # columns 0::2 = sin, 1::2 = cos (interleaved, same as the torch fill)
    return jnp.stack([jnp.sin(angle), jnp.cos(angle)], axis=-1).reshape(
        max_len, d_model)


def _pe_add_kernel(x_ref, pe_ref, o_ref):
    """x_ref/o_ref: (bs, B*D) slab of the flattened [S, B*D] view.
    pe_ref: (bs, D), shared across the batch copies."""
    _, d_model = pe_ref.shape
    reps = x_ref.shape[1] // d_model          # == batch size B (static)
    pe = pe_ref[...]                          # f32, loaded once per tile
    for b in range(reps):                     # static unroll; lane-aligned slices
        sl = slice(b * d_model, (b + 1) * d_model)
        o_ref[:, sl] = (x_ref[:, sl] + pe).astype(o_ref.dtype)


def _pick_block_seq(S, B, D, x_itemsize, out_itemsize,
                    vmem_budget=10 * 1024 * 1024):
    """Seq rows per tile so double-buffered (x + pe + out) tiles fit the budget."""
    per_pos = 2 * (B * D * x_itemsize + D * 4 + B * D * out_itemsize)
    bs = max(1, vmem_budget // per_pos)
    bs = min(bs, S, 1024)
    if bs < S:
        bs = max(8, (bs // 8) * 8)            # sublane-aligned block rows
        bs = min(bs, S)
    return int(bs)


def positional_encoding(x, pe=None, *, block_seq=None):
    """x: [S, B, D].  Returns x + pe[:S] broadcast over batch (eval-mode dropout)."""
    S, B, D = x.shape
    if pe is None:
        pe = make_positional_encoding(D, S)
    pe = pe[:S].astype(jnp.float32)                      # == self.pe[:x.size(0)]
    out_dtype = jnp.promote_types(x.dtype, pe.dtype)     # matches torch add promotion

    x_itemsize = jnp.dtype(x.dtype).itemsize
    out_itemsize = jnp.dtype(out_dtype).itemsize
    if block_seq is None:
        block_seq = _pick_block_seq(S, B, D, x_itemsize, out_itemsize)
    grid = (pl.cdiv(S, block_seq),)

    # Free reshape to a lane/sublane-dense 2D slab (array is contiguous).
    x2 = x.reshape(S, B * D)

    cp = dict(dimension_semantics=("parallel",))
    vmem_need = 2 * block_seq * (B * D * x_itemsize + D * 4 + B * D * out_itemsize)
    if vmem_need > 12 * 1024 * 1024:
        # user-requested large tiles: raise scoped VMEM (stays v5e/v7x-safe)
        cp["vmem_limit_bytes"] = min(int(vmem_need * 3 // 2), 30 * 1024 * 1024)

    out2 = pl.pallas_call(
        _pe_add_kernel,
        out_shape=jax.ShapeDtypeStruct((S, B * D), out_dtype),
        grid_spec=pltpu.PrefetchScalarGridSpec(
            num_scalar_prefetch=0,
            grid=grid,
            in_specs=[pl.BlockSpec((block_seq, B * D), lambda i: (i, 0)),
                      pl.BlockSpec((block_seq, D), lambda i: (i, 0))],
            out_specs=pl.BlockSpec((block_seq, B * D), lambda i: (i, 0)),
        ),
        compiler_params=pltpu.CompilerParams(**cp),
    )(x2, pe)
    return out2.reshape(S, B, D)


def _reference(x, pe=None):
    """Pure-JAX reference matching the torch module forward."""
    S, B, D = x.shape
    if pe is None:
        pe = make_positional_encoding(D, S)
    return x + pe[:S, None, :]


if __name__ == "__main__":
    D = 512  # d_model from the module spec
    key = jax.random.PRNGKey(0)

    # module layout: [seq, batch, d_model] -> seq=8, batch=2
    x = jax.random.normal(key, (8, 2, D), dtype=jnp.float32)
    out = positional_encoding(x)
    out = jax.block_until_ready(out)
    assert out.shape == x.shape and out.dtype == jnp.float32
    assert jnp.allclose(out, _reference(x), atol=1e-5, rtol=1e-5)

    # multi-step grid (exercises the pipelined, tiled path): seq=64, block_seq=16
    x2 = jax.random.normal(jax.random.PRNGKey(1), (64, 2, D), dtype=jnp.float32)
    out2 = jax.block_until_ready(positional_encoding(x2, block_seq=16))
    assert jnp.allclose(out2, _reference(x2), atol=1e-5, rtol=1e-5)

    print("KERNEL_OK")
</pallas_src>

<mosaic_0001>
module attributes {stable_mosaic.version = 11 : i64} {
  func.func @_pe_add_kernel(%arg0: i32, %arg1: memref<8x1024xf32, #tpu.memory_space<vmem>>, %arg2: memref<8x512xf32, #tpu.memory_space<vmem>>, %arg3: memref<8x1024xf32, #tpu.memory_space<vmem>>) attributes {dimension_semantics = [#tpu.dimension_semantics<parallel>], iteration_bounds = array<i64: 1>, scalar_prefetch = 0 : i64, scratch_operands = 0 : i64, tpu.core_type = #tpu.core_type<tc>, window_params = [{transform_indices = @transform_0, window_bounds = array<i64: 8, 1024>}, {transform_indices = @transform_1, window_bounds = array<i64: 8, 512>}, {transform_indices = @transform_2, window_bounds = array<i64: 8, 1024>}]} {
    %c0 = arith.constant 0 : index
    %c0_0 = arith.constant 0 : index
    %0 = vector.load %arg2[%c0, %c0_0] : memref<8x512xf32, #tpu.memory_space<vmem>>, vector<8x512xf32>
    %c0_1 = arith.constant 0 : index
    %c0_2 = arith.constant 0 : index
    %1 = vector.load %arg1[%c0_1, %c0_2] : memref<8x1024xf32, #tpu.memory_space<vmem>>, vector<8x512xf32>
    %2 = arith.addf %1, %0 : vector<8x512xf32>
    %c0_3 = arith.constant 0 : index
    %c0_4 = arith.constant 0 : index
    %3 = vector.load %arg3[%c0_3, %c0_4] : memref<8x1024xf32, #tpu.memory_space<vmem>>, vector<8x512xf32>
    tpu.vector_store %arg3[%c0_3, %c0_4], %2 {strides = array<i32>} : memref<8x1024xf32, #tpu.memory_space<vmem>>, vector<8x512xf32>,
    %c0_5 = arith.constant 0 : index
    %c512 = arith.constant 512 : index
    %4 = vector.load %arg1[%c0_5, %c512] : memref<8x1024xf32, #tpu.memory_space<vmem>>, vector<8x512xf32>
    %5 = arith.addf %4, %0 : vector<8x512xf32>
    %c0_6 = arith.constant 0 : index
    %c512_7 = arith.constant 512 : index
    %6 = vector.load %arg3[%c0_6, %c512_7] : memref<8x1024xf32, #tpu.memory_space<vmem>>, vector<8x512xf32>
    tpu.vector_store %arg3[%c0_6, %c512_7], %5 {strides = array<i32>} : memref<8x1024xf32, #tpu.memory_space<vmem>>, vector<8x512xf32>,
    return
  }
  func.func @transform_0(%arg0: i32) -> (i32, i32) {
    %c0_i32 = arith.constant 0 : i32
    %c0_i32_0 = arith.constant 0 : i32
    return %arg0, %c0_i32 : i32, i32
  }
  func.func @transform_1(%arg0: i32) -> (i32, i32) {
    %c0_i32 = arith.constant 0 : i32
    %c0_i32_0 = arith.constant 0 : i32
    return %arg0, %c0_i32 : i32, i32
  }
  func.func @transform_2(%arg0: i32) -> (i32, i32) {
    %c0_i32 = arith.constant 0 : i32
    %c0_i32_0 = arith.constant 0 : i32
    return %arg0, %c0_i32 : i32, i32
  }
}

</mosaic_0001>

<llo_original>
// kernel: tpu_custom_call.1
$region0: #{tpu_custom_call.1}
  #allocation0 [shape = 'u32[]', space=smem, size = 0x4, offset = 0x4, fixed_abs, tag = 'smem constant byte address 0x4 - core index']
  #allocation1 [shape = 'u32[144,128]{1,0:T(1,128)}', space=vmem, size = 0x12000, scoped, tag = 'internal scratch']
  %s0 = inlined_call_operand.hbm [shape: f32[8,1024], index: 0, kind: input, shape index: {}]
  %s1 = inlined_call_operand.hbm [shape: f32[8,512], index: 1, kind: input, shape index: {}]
  %s2 = inlined_call_operand.hbm [shape: f32[8,1024], index: 2, kind: output, shape index: {}]
  %s3 = sld [smem:[#allocation0]]
  $region26: #{tpu_custom_call.1} parent=0
    _
  %s5 = ssub.s32 1, %s3
  %s6 = scalar_select 0, %s5, %s3
  $region1: #{tpu_custom_call.1} parent=0
    #allocation2 [shape = 'u8[32768]{0}', space=vmem, size = 0x8000, scoped, tag = 'input window, operand 0, single buffered']
    #allocation3 [shape = 's32[1]{0}', space=sflag, size = 0x4, scoped, tag = 'scoped memory for tpu_custom_call.1']
    #allocation4 [shape = 's32[1]{0}', space=sflag, size = 0x4, scoped, tag = 'scoped memory for tpu_custom_call.1']
    #allocation5 [shape = 'u8[16384]{0}', space=vmem, size = 0x4000, scoped, tag = 'input window, operand 1, single buffered']
    #allocation6 [shape = 's32[1]{0}', space=sflag, size = 0x4, scoped, tag = 'scoped memory for tpu_custom_call.1']
    #allocation7 [shape = 'u8[32768]{0}', space=vmem, size = 0x8000, scoped, tag = 'output window, operand 0, single buffered']
    %7 = vsyncpa [#allocation3], 0
    %8 = vsyncpa [#allocation6], 0
    %9 = vsyncpa [#allocation4], 0
    // Predicated region
    $region2: #{tpu_custom_call.1} parent=1 // pred_check
      _
    $region3: #{tpu_custom_call.1} parent=1 // pred_check_branch
      %11 = sbr.rel (0) target = $region5
    $region4: #{tpu_custom_call.1} parent=1 // pred_region
      %s13 = ssub.s32 1024, 1024
      %14 = vsyncadd [#allocation3], %s13
      %s16 = sshll.u32 [#allocation2], 4
      %s17 = int_to_ptr.vmem [resolvable:$true] %s16
      %19 = dma.hbm_to_vmem [thread:$0]  %s0, 1024, %s17, [#allocation3]
    $region5: #{tpu_custom_call.1} parent=1 // pred_fallthru
      _
    // Predicated region
    $region6: #{tpu_custom_call.1} parent=1 // pred_check
      _
    $region7: #{tpu_custom_call.1} parent=1 // pred_check_branch
      %21 = sbr.rel (0) target = $region9
    $region8: #{tpu_custom_call.1} parent=1 // pred_region
      %s23 = ssub.s32 512, 512
      %24 = vsyncadd [#allocation6], %s23
      %s26 = sshll.u32 [#allocation5], 4
      %s27 = int_to_ptr.vmem [resolvable:$true] %s26
      %29 = dma.hbm_to_vmem [thread:$0]  %s1, 512, %s27, [#allocation6]
    $region9: #{tpu_custom_call.1} parent=1 // pred_fallthru
      _
    // Predicated region
    $region10: #{tpu_custom_call.1} parent=1 // pred_check
      _
    $region11: #{tpu_custom_call.1} parent=1 // pred_check_branch
      %31 = sbr.rel (0) target = $region13
    $region12: #{tpu_custom_call.1} parent=1 // pred_region
      %32 = dma.done [#allocation3], 1024
    $region13: #{tpu_custom_call.1} parent=1 // pred_fallthru
      _
    // Predicated region
    $region14: #{tpu_custom_call.1} parent=1 // pred_check
      _
    $region15: #{tpu_custom_call.1} parent=1 // pred_check_branch
      %34 = sbr.rel (0) target = $region17
    $region16: #{tpu_custom_call.1} parent=1 // pred_region
      %35 = dma.done [#allocation6], 512
    $region17: #{tpu_custom_call.1} parent=1 // pred_fallthru
      _
    %v36 = vld [vmem:[#allocation5] sm:$0xff]
    %v37 = vld [vmem:[#allocation5 + $0x8] sm:$0xff]
    %v38 = vld [vmem:[#allocation5 + $0x10] sm:$0xff]
    %v39 = vld [vmem:[#allocation5 + $0x18] sm:$0xff]
    %v40 = vld [vmem:[#allocation2] sm:$0xff]
    %v41 = vld [vmem:[#allocation2 + $0x8] sm:$0xff]
    %v42 = vld [vmem:[#allocation2 + $0x10] sm:$0xff]
    %v43 = vld [vmem:[#allocation2 + $0x18] sm:$0xff]
    %v44 = vadd.f32 %v40, %v36
    %v45 = vadd.f32 %v41, %v37
    %v46 = vadd.f32 %v42, %v38
    %v47 = vadd.f32 %v43, %v39
    %48 = vst [vmem:[#allocation7] sm:$0xff] %v44
    %49 = vst [vmem:[#allocation7 + $0x8] sm:$0xff] %v45
    %50 = vst [vmem:[#allocation7 + $0x10] sm:$0xff] %v46
    %51 = vst [vmem:[#allocation7 + $0x18] sm:$0xff] %v47
    %v52 = vld [vmem:[#allocation2 + $0x20] sm:$0xff]
    %v53 = vld [vmem:[#allocation2 + $0x28] sm:$0xff]
    %v54 = vld [vmem:[#allocation2 + $0x30] sm:$0xff]
    %v55 = vld [vmem:[#allocation2 + $0x38] sm:$0xff]
    %v56 = vadd.f32 %v52, %v36
    %v57 = vadd.f32 %v53, %v37
    %v58 = vadd.f32 %v54, %v38
    %v59 = vadd.f32 %v55, %v39
    %60 = vst [vmem:[#allocation7 + $0x20] sm:$0xff] %v56
    %61 = vst [vmem:[#allocation7 + $0x28] sm:$0xff] %v57
    %62 = vst [vmem:[#allocation7 + $0x30] sm:$0xff] %v58
    %63 = vst [vmem:[#allocation7 + $0x38] sm:$0xff] %v59
    // Predicated region
    $region18: #{tpu_custom_call.1} parent=1 // pred_check
      _
    $region19: #{tpu_custom_call.1} parent=1 // pred_check_branch
      %65 = sbr.rel (0) target = $region21
    $region20: #{tpu_custom_call.1} parent=1 // pred_region
      %s67 = ssub.s32 1024, 1024
      %68 = vsyncadd [#allocation4], %s67
      %s70 = sshll.u32 [#allocation7], 4
      %s71 = int_to_ptr.vmem [resolvable:$true] %s70
      %73 = dma.vmem_to_hbm [thread:$0]  %s71, 1024, %s2, [#allocation4]
    $region21: #{tpu_custom_call.1} parent=1 // pred_fallthru
      _
    // Predicated region
    $region22: #{tpu_custom_call.1} parent=1 // pred_check
      _
    $region23: #{tpu_custom_call.1} parent=1 // pred_check_branch
      %75 = sbr.rel (0) target = $region25
    $region24: #{tpu_custom_call.1} parent=1 // pred_region
      %76 = dma.done [#allocation4], 1024
    $region25: #{tpu_custom_call.1} parent=1 // pred_fallthru
      _
    %77 = vsyncpa [#allocation3], 1
    %78 = vsyncpa [#allocation6], 1
    %79 = vsyncpa [#allocation4], 1

</llo_original>
